<compile_context>
chip_gen: v7x
topology: tpu7x:2x2x1
jax: 0.10.0
libtpu: 0.0.40
codegen_flags: <defaults>
</compile_context>

<pallas_src>
import functools

import jax
import jax.numpy as jnp
from jax.experimental import pallas as pl
from jax.experimental.pallas import tpu as pltpu

BN_EPS = 1e-5
_TH_MAX = 2048                    # pooled rows per grid step (=> 4096 conv rows), mult of 128
_VMEM_LIMIT = 32 * 1024 * 1024    # explicit; above v5e's 16 MiB scoped default


def _round_up(x, m):
    return ((x + m - 1) // m) * m


def _stats_kernel(w_ref, xe_ref, xo_ref, mom_ref, *, th, l_conv):
    """Phase 1: per-channel sum / sum-of-squares of the conv output, accumulated over j."""
    j = pl.program_id(1)

    @pl.when(j == 0)
    def _():
        mom_ref[...] = jnp.zeros_like(mom_ref)

    w = w_ref[...]                                                      # (co_pad, fs*Ci) bf16
    acc_e = jnp.dot(w, xe_ref[0], preferred_element_type=jnp.float32)   # (co_pad, th) f32
    acc_o = jnp.dot(w, xo_ref[0], preferred_element_type=jnp.float32)

    # Mask conv rows past the true conv length (ragged last tile / odd l_conv).
    col = jax.lax.broadcasted_iota(jnp.int32, (1, th), 1) + j * th      # pooled index
    me = jnp.where(2 * col < l_conv, acc_e, 0.0)
    mo = jnp.where(2 * col + 1 < l_conv, acc_o, 0.0)
    psum = jnp.sum(me, axis=1, keepdims=True) + jnp.sum(mo, axis=1, keepdims=True)
    psq = jnp.sum(me * acc_e, axis=1, keepdims=True) + jnp.sum(mo * acc_o, axis=1, keepdims=True)
    mom_ref[0] += jnp.concatenate([psum, psq], axis=1)                  # (co_pad, 2)


def _apply_kernel(w_ref, xe_ref, xo_ref, scale_ref, shift_ref, o_ref, *, co):
    """Phase 2: conv (recomputed) -> fused BN scale/shift -> ReLU -> MaxPool(2, 2)."""
    w = w_ref[...]                                                      # (co_pad, fs*Ci) bf16
    acc_e = jnp.dot(w, xe_ref[0], preferred_element_type=jnp.float32)   # even conv rows
    acc_o = jnp.dot(w, xo_ref[0], preferred_element_type=jnp.float32)   # odd conv rows
    s = scale_ref[...]                                                  # (co_pad, 1) f32
    t = shift_ref[...]
    ye = jnp.maximum(acc_e * s + t, 0.0)
    yo = jnp.maximum(acc_o * s + t, 0.0)
    y = jnp.maximum(ye, yo)                                             # (co_pad, th) pooled
    o_ref[0] = y[:co, :].astype(o_ref.dtype)                            # NCL layout directly


def sandwich_forward(x, w, b, gamma, beta, *, out_dtype=jnp.float32):
    """x: (N, C_in, L) f32, w: (C_out, C_in, fs), b/gamma/beta: (C_out,) -> (N, C_out, L//2)."""
    del b          # conv bias is exactly cancelled by training-mode BN mean subtraction
    N, Ci, L = x.shape
    Co, _, fs = w.shape
    pad = (fs - 1) // 2
    l_conv = L + 2 * pad - fs + 1          # conv output length
    assert l_conv >= 2, "MaxPool(2,2) needs at least 2 conv output positions"
    l_half = l_conv // 2                   # pooled output length
    l_half_c = (l_conv + 1) // 2           # pooled rows needed to cover ALL conv rows (BN stats)

    if l_half_c <= _TH_MAX:
        th, gl = l_half_c, 1               # one tile: any size OK (block == full dim)
    else:
        th, gl = _TH_MAX, pl.cdiv(l_half_c, _TH_MAX)   # th multiple of 128 -> lane-dense
    lh_pad = gl * th

    co_pad = _round_up(Co, 8)
    kc = fs * Ci

    # ---- layout prep in plain JAX (input is tiny relative to the output) ----
    # im2col (channels-first) folds the fs taps into the MXU contraction and pre-splits
    # even/odd conv rows for the pool.  When chaining Sandwich blocks, the producer
    # layer can emit this packing directly.
    tot_len = 2 * lh_pad + fs - 1
    x_p = jnp.pad(x.astype(jnp.bfloat16), ((0, 0), (0, 0), (pad, tot_len - pad - L)))
    xi = jnp.concatenate([x_p[:, :, k:k + 2 * lh_pad] for k in range(fs)], axis=1)
    x_even = xi[:, :, 0::2]                # (N, fs*Ci, lh_pad), even conv rows
    x_odd = xi[:, :, 1::2]                 # (N, fs*Ci, lh_pad), odd conv rows

    w2 = jnp.transpose(w, (0, 2, 1)).reshape(Co, kc)      # [o, k*Ci + c] = w[o, c, k]
    w2 = jnp.pad(w2, ((0, co_pad - Co), (0, 0))).astype(jnp.bfloat16)
    g_p = jnp.pad(gamma.astype(jnp.float32), (0, co_pad - Co))
    beta_p = jnp.pad(beta.astype(jnp.float32), (0, co_pad - Co))

    w_spec = pl.BlockSpec((co_pad, kc), lambda n, j: (0, 0))
    x_spec = pl.BlockSpec((1, kc, th), lambda n, j: (n, 0, j))
    v_spec = pl.BlockSpec((co_pad, 1), lambda n, j: (0, 0))

    # ---------------- phase 1: batch-norm statistics ----------------
    mom = pl.pallas_call(
        functools.partial(_stats_kernel, th=th, l_conv=l_conv),
        out_shape=jax.ShapeDtypeStruct((N, co_pad, 2), jnp.float32),
        grid=(N, gl),
        in_specs=[w_spec, x_spec, x_spec],
        out_specs=pl.BlockSpec((1, co_pad, 2), lambda n, j: (n, 0, 0)),   # accumulate over j
        compiler_params=pltpu.CompilerParams(
            dimension_semantics=("parallel", "arbitrary"),
            vmem_limit_bytes=_VMEM_LIMIT),
    )(w2, x_even, x_odd)

    # Tiny per-channel math in plain JAX: mean/var -> fused affine (scale, shift).
    tot = jnp.sum(mom, axis=0)             # (co_pad, 2)
    cnt = float(N * l_conv)
    mean = tot[:, 0] / cnt
    # one-pass E[x^2]-E[x]^2 on f32 partials of the bf16-MXU conv; clamp guards residue.
    var = jnp.maximum(tot[:, 1] / cnt - mean * mean, 0.0)
    inv = jax.lax.rsqrt(var + BN_EPS)
    scale = (g_p * inv).reshape(co_pad, 1)
    shift = (beta_p - mean * g_p * inv).reshape(co_pad, 1)

    # ---------------- phase 2: conv -> BN -> ReLU -> MaxPool ----------------
    out = pl.pallas_call(
        functools.partial(_apply_kernel, co=Co),
        out_shape=jax.ShapeDtypeStruct((N, Co, lh_pad), out_dtype),
        grid=(N, gl),
        in_specs=[w_spec, x_spec, x_spec, v_spec, v_spec],
        out_specs=pl.BlockSpec((1, Co, th), lambda n, j: (n, 0, j)),
        compiler_params=pltpu.CompilerParams(
            dimension_semantics=("parallel", "parallel"),
            vmem_limit_bytes=_VMEM_LIMIT),
    )(w2, x_even, x_odd, scale, shift)

    if lh_pad != l_half:                   # ragged tail only; pooled rows >= l_half dropped
        out = out[:, :, :l_half]
    return out


def sandwich_reference(x, w, b, gamma, beta):
    """Pure-JAX f32 reference mirroring the PyTorch module (training-mode BN)."""
    Co, _, fs = w.shape
    pad = (fs - 1) // 2
    y = jax.lax.conv_general_dilated(
        x, w, window_strides=(1,), padding=[(pad, pad)],
        dimension_numbers=("NCH", "OIH", "NCH"))
    y = y + b[None, :, None]
    mean = jnp.mean(y, axis=(0, 2), keepdims=True)
    var = jnp.mean((y - mean) ** 2, axis=(0, 2), keepdims=True)
    y = (y - mean) * jax.lax.rsqrt(var + BN_EPS)
    y = y * gamma[None, :, None] + beta[None, :, None]
    y = jnp.maximum(y, 0.0)
    lh = y.shape[2] // 2
    return jnp.max(y[:, :, :lh * 2].reshape(y.shape[0], Co, lh, 2), axis=3)


if __name__ == "__main__":
    # Small shapes consistent with the module: Conv1d input is (N, C_in, L).
    N, C_IN, C_OUT, L, FS = 2, 4, 8, 16, 3

    key = jax.random.PRNGKey(0)
    kx, kw, kb, kg, kbe = jax.random.split(key, 5)
    x = jax.random.normal(kx, (N, C_IN, L), dtype=jnp.float32)
    w = jax.random.normal(kw, (C_OUT, C_IN, FS), dtype=jnp.float32) * 0.3
    b = jax.random.normal(kb, (C_OUT,), dtype=jnp.float32) * 0.1
    gamma = 1.0 + 0.1 * jax.random.normal(kg, (C_OUT,), dtype=jnp.float32)
    beta = 0.1 * jax.random.normal(kbe, (C_OUT,), dtype=jnp.float32)

    fwd = jax.jit(sandwich_forward)
    out = jax.block_until_ready(fwd(x, w, b, gamma, beta))
    ref = jax.block_until_ready(sandwich_reference(x, w, b, gamma, beta))

    assert out.shape == (N, C_OUT, L // 2), out.shape
    # bf16 MXU operands -> compare against the f32 reference with bf16-level tolerance.
    max_err = float(jnp.max(jnp.abs(out - ref)))
    assert jnp.allclose(out, ref, rtol=4e-2, atol=4e-2), max_err
    print("KERNEL_OK")
</pallas_src>

<mosaic_0001>
module attributes {stable_mosaic.version = 11 : i64} {
  func.func @_stats_kernel(%arg0: i32, %arg1: i32, %arg2: memref<8x12xbf16, #tpu.memory_space<vmem>>, %arg3: memref<1x12x8xbf16, #tpu.memory_space<vmem>>, %arg4: memref<1x12x8xbf16, #tpu.memory_space<vmem>>, %arg5: memref<1x8x2xf32, #tpu.memory_space<vmem>>) attributes {dimension_semantics = [#tpu.dimension_semantics<parallel>, #tpu.dimension_semantics<arbitrary>], iteration_bounds = array<i64: 2, 1>, scalar_prefetch = 0 : i64, scratch_operands = 0 : i64, tpu.core_type = #tpu.core_type<tc>, window_params = [{pipeline_mode = #tpu.pipeline_mode<synchronous>, transform_indices = @transform_0, window_bounds = array<i64: 8, 12>}, {transform_indices = @transform_1, window_bounds = array<i64: 1, 12, 8>}, {transform_indices = @transform_2, window_bounds = array<i64: 1, 12, 8>}, {transform_indices = @transform_3, window_bounds = array<i64: 1, 8, 2>}]} {
    %c0_i32 = arith.constant 0 : i32
    %0 = arith.cmpi eq, %arg1, %c0_i32 : i32
    %1 = arith.extui %0 : i1 to i32
    %c0_i32_0 = arith.constant 0 : i32
    %2 = arith.cmpi ne, %1, %c0_i32_0 : i32
    scf.if %2 {
      %cst_23 = arith.constant 0.000000e+00 : f32
      %51 = vector.broadcast %cst_23 : f32 to vector<1x8x2xf32>
      %c0_24 = arith.constant 0 : index
      %c0_25 = arith.constant 0 : index
      %c0_26 = arith.constant 0 : index
      %52 = vector.load %arg5[%c0_24, %c0_25, %c0_26] : memref<1x8x2xf32, #tpu.memory_space<vmem>>, vector<1x8x2xf32>
      tpu.vector_store %arg5[%c0_24, %c0_25, %c0_26], %51 {strides = array<i32>} : memref<1x8x2xf32, #tpu.memory_space<vmem>>, vector<1x8x2xf32>,
    } else {
    }
    %c0 = arith.constant 0 : index
    %c0_1 = arith.constant 0 : index
    %3 = vector.load %arg2[%c0, %c0_1] : memref<8x12xbf16, #tpu.memory_space<vmem>>, vector<8x12xbf16>
    %c0_2 = arith.constant 0 : index
    %c0_3 = arith.constant 0 : index
    %c0_4 = arith.constant 0 : index
    %4 = vector.load %arg3[%c0_2, %c0_3, %c0_4] : memref<1x12x8xbf16, #tpu.memory_space<vmem>>, vector<1x12x8xbf16>
    %5 = vector.shape_cast %4 : vector<1x12x8xbf16> to vector<12x8xbf16>
    %cst = arith.constant dense<0.000000e+00> : vector<8x8xf32>
    %6 = tpu.matmul %3, %5, %cst {dimension_numbers = #tpu.dot_dimension_numbers<[1], [0], [0], [1], [0, 0, 1, 1], [], []>} : vector<8x12xbf16>, vector<12x8xbf16>, vector<8x8xf32> -> vector<8x8xf32>
    %c0_5 = arith.constant 0 : index
    %c0_6 = arith.constant 0 : index
    %c0_7 = arith.constant 0 : index
    %7 = vector.load %arg4[%c0_5, %c0_6, %c0_7] : memref<1x12x8xbf16, #tpu.memory_space<vmem>>, vector<1x12x8xbf16>
    %8 = vector.shape_cast %7 : vector<1x12x8xbf16> to vector<12x8xbf16>
    %cst_8 = arith.constant dense<0.000000e+00> : vector<8x8xf32>
    %9 = tpu.matmul %3, %8, %cst_8 {dimension_numbers = #tpu.dot_dimension_numbers<[1], [0], [0], [1], [0, 0, 1, 1], [], []>} : vector<8x12xbf16>, vector<12x8xbf16>, vector<8x8xf32> -> vector<8x8xf32>
    %10 = tpu.iota {dimensions = array<i32: 1>} : vector<1x8xi32>
    %c8_i32 = arith.constant 8 : i32
    %11 = arith.muli %arg1, %c8_i32 : i32
    %12 = vector.broadcast %11 : i32 to vector<1x8xi32>
    %13 = arith.addi %10, %12 : vector<1x8xi32>
    %c2_i32 = arith.constant 2 : i32
    %14 = vector.broadcast %c2_i32 : i32 to vector<1x8xi32>
    %15 = arith.muli %14, %13 : vector<1x8xi32>
    %c16_i32 = arith.constant 16 : i32
    %16 = vector.broadcast %c16_i32 : i32 to vector<1x8xi32>
    %17 = arith.cmpi slt, %15, %16 : vector<1x8xi32>
    %cst_9 = arith.constant 0.000000e+00 : f32
    %18 = vector.shape_cast %17 : vector<1x8xi1> to vector<1x8xi1>
    %19 = vector.broadcast %18 : vector<1x8xi1> to vector<8x8xi1>
    %20 = vector.broadcast %cst_9 : f32 to vector<8x8xf32>
    %21 = arith.select %19, %6, %20 : vector<8x8xi1>, vector<8x8xf32>
    %c2_i32_10 = arith.constant 2 : i32
    %22 = vector.broadcast %c2_i32_10 : i32 to vector<1x8xi32>
    %23 = arith.muli %22, %13 : vector<1x8xi32>
    %c1_i32 = arith.constant 1 : i32
    %24 = vector.broadcast %c1_i32 : i32 to vector<1x8xi32>
    %25 = arith.addi %23, %24 : vector<1x8xi32>
    %c16_i32_11 = arith.constant 16 : i32
    %26 = vector.broadcast %c16_i32_11 : i32 to vector<1x8xi32>
    %27 = arith.cmpi slt, %25, %26 : vector<1x8xi32>
    %cst_12 = arith.constant 0.000000e+00 : f32
    %28 = vector.shape_cast %27 : vector<1x8xi1> to vector<1x8xi1>
    %29 = vector.broadcast %28 : vector<1x8xi1> to vector<8x8xi1>
    %30 = vector.broadcast %cst_12 : f32 to vector<8x8xf32>
    %31 = arith.select %29, %9, %30 : vector<8x8xi1>, vector<8x8xf32>
    %cst_13 = arith.constant dense<0.000000e+00> : vector<8xf32>
    %32 = vector.multi_reduction <add>, %21, %cst_13 [1] : vector<8x8xf32> to vector<8xf32>
    %33 = vector.shape_cast %32 : vector<8xf32> to vector<8x1xf32>
    %cst_14 = arith.constant dense<0.000000e+00> : vector<8xf32>
    %34 = vector.multi_reduction <add>, %31, %cst_14 [1] : vector<8x8xf32> to vector<8xf32>
    %35 = vector.shape_cast %34 : vector<8xf32> to vector<8x1xf32>
    %36 = arith.addf %33, %35 : vector<8x1xf32>
    %37 = arith.mulf %21, %6 : vector<8x8xf32>
    %cst_15 = arith.constant dense<0.000000e+00> : vector<8xf32>
    %38 = vector.multi_reduction <add>, %37, %cst_15 [1] : vector<8x8xf32> to vector<8xf32>
    %39 = vector.shape_cast %38 : vector<8xf32> to vector<8x1xf32>
    %40 = arith.mulf %31, %9 : vector<8x8xf32>
    %cst_16 = arith.constant dense<0.000000e+00> : vector<8xf32>
    %41 = vector.multi_reduction <add>, %40, %cst_16 [1] : vector<8x8xf32> to vector<8xf32>
    %42 = vector.shape_cast %41 : vector<8xf32> to vector<8x1xf32>
    %43 = arith.addf %39, %42 : vector<8x1xf32>
    %c0_17 = arith.constant 0 : index
    %c0_18 = arith.constant 0 : index
    %c0_19 = arith.constant 0 : index
    %44 = vector.load %arg5[%c0_17, %c0_18, %c0_19] : memref<1x8x2xf32, #tpu.memory_space<vmem>>, vector<1x8x2xf32>
    %45 = vector.shape_cast %44 : vector<1x8x2xf32> to vector<8x2xf32>
    %46 = tpu.concatenate %36, %43 in 1 : vector<8x1xf32>, vector<8x1xf32> -> vector<8x2xf32>
    %47 = arith.addf %45, %46 : vector<8x2xf32>
    %c0_20 = arith.constant 0 : index
    %c0_21 = arith.constant 0 : index
    %c0_22 = arith.constant 0 : index
    %48 = vector.load %arg5[%c0_20, %c0_21, %c0_22] : memref<1x8x2xf32, #tpu.memory_space<vmem>>, vector<1x8x2xf32>
    %49 = vector.shape_cast %48 : vector<1x8x2xf32> to vector<8x2xf32>
    %50 = vector.shape_cast %47 : vector<8x2xf32> to vector<1x8x2xf32>
    tpu.vector_store %arg5[%c0_20, %c0_21, %c0_22], %50 {strides = array<i32>} : memref<1x8x2xf32, #tpu.memory_space<vmem>>, vector<1x8x2xf32>,
    return
  }
  func.func @transform_0(%arg0: i32, %arg1: i32) -> (i32, i32) {
    %c0_i32 = arith.constant 0 : i32
    %c0_i32_0 = arith.constant 0 : i32
    %c0_i32_1 = arith.constant 0 : i32
    return %c0_i32, %c0_i32_0 : i32, i32
  }
  func.func @transform_1(%arg0: i32, %arg1: i32) -> (i32, i32, i32) {
    %c0_i32 = arith.constant 0 : i32
    %c0_i32_0 = arith.constant 0 : i32
    return %arg0, %c0_i32, %arg1 : i32, i32, i32
  }
  func.func @transform_2(%arg0: i32, %arg1: i32) -> (i32, i32, i32) {
    %c0_i32 = arith.constant 0 : i32
    %c0_i32_0 = arith.constant 0 : i32
    return %arg0, %c0_i32, %arg1 : i32, i32, i32
  }
  func.func @transform_3(%arg0: i32, %arg1: i32) -> (i32, i32, i32) {
    %c0_i32 = arith.constant 0 : i32
    %c0_i32_0 = arith.constant 0 : i32
    %c0_i32_1 = arith.constant 0 : i32
    return %arg0, %c0_i32, %c0_i32_0 : i32, i32, i32
  }
}

module attributes {stable_mosaic.version = 11 : i64} {
  func.func @_apply_kernel(%arg0: i32, %arg1: i32, %arg2: memref<8x12xbf16, #tpu.memory_space<vmem>>, %arg3: memref<1x12x8xbf16, #tpu.memory_space<vmem>>, %arg4: memref<1x12x8xbf16, #tpu.memory_space<vmem>>, %arg5: memref<8x1xf32, #tpu.memory_space<vmem>>, %arg6: memref<8x1xf32, #tpu.memory_space<vmem>>, %arg7: memref<1x8x8xf32, #tpu.memory_space<vmem>>) attributes {dimension_semantics = [#tpu.dimension_semantics<parallel>, #tpu.dimension_semantics<parallel>], iteration_bounds = array<i64: 2, 1>, scalar_prefetch = 0 : i64, scratch_operands = 0 : i64, tpu.core_type = #tpu.core_type<tc>, window_params = [{pipeline_mode = #tpu.pipeline_mode<synchronous>, transform_indices = @transform_0, window_bounds = array<i64: 8, 12>}, {transform_indices = @transform_1, window_bounds = array<i64: 1, 12, 8>}, {transform_indices = @transform_2, window_bounds = array<i64: 1, 12, 8>}, {pipeline_mode = #tpu.pipeline_mode<synchronous>, transform_indices = @transform_3, window_bounds = array<i64: 8, 1>}, {pipeline_mode = #tpu.pipeline_mode<synchronous>, transform_indices = @transform_4, window_bounds = array<i64: 8, 1>}, {transform_indices = @transform_5, window_bounds = array<i64: 1, 8, 8>}]} {
    %c0 = arith.constant 0 : index
    %c0_0 = arith.constant 0 : index
    %0 = vector.load %arg2[%c0, %c0_0] : memref<8x12xbf16, #tpu.memory_space<vmem>>, vector<8x12xbf16>
    %c0_1 = arith.constant 0 : index
    %c0_2 = arith.constant 0 : index
    %c0_3 = arith.constant 0 : index
    %1 = vector.load %arg3[%c0_1, %c0_2, %c0_3] : memref<1x12x8xbf16, #tpu.memory_space<vmem>>, vector<1x12x8xbf16>
    %2 = vector.shape_cast %1 : vector<1x12x8xbf16> to vector<12x8xbf16>
    %cst = arith.constant dense<0.000000e+00> : vector<8x8xf32>
    %3 = tpu.matmul %0, %2, %cst {dimension_numbers = #tpu.dot_dimension_numbers<[1], [0], [0], [1], [0, 0, 1, 1], [], []>} : vector<8x12xbf16>, vector<12x8xbf16>, vector<8x8xf32> -> vector<8x8xf32>
    %c0_4 = arith.constant 0 : index
    %c0_5 = arith.constant 0 : index
    %c0_6 = arith.constant 0 : index
    %4 = vector.load %arg4[%c0_4, %c0_5, %c0_6] : memref<1x12x8xbf16, #tpu.memory_space<vmem>>, vector<1x12x8xbf16>
    %5 = vector.shape_cast %4 : vector<1x12x8xbf16> to vector<12x8xbf16>
    %cst_7 = arith.constant dense<0.000000e+00> : vector<8x8xf32>
    %6 = tpu.matmul %0, %5, %cst_7 {dimension_numbers = #tpu.dot_dimension_numbers<[1], [0], [0], [1], [0, 0, 1, 1], [], []>} : vector<8x12xbf16>, vector<12x8xbf16>, vector<8x8xf32> -> vector<8x8xf32>
    %c0_8 = arith.constant 0 : index
    %c0_9 = arith.constant 0 : index
    %7 = vector.load %arg5[%c0_8, %c0_9] : memref<8x1xf32, #tpu.memory_space<vmem>>, vector<8x1xf32>
    %c0_10 = arith.constant 0 : index
    %c0_11 = arith.constant 0 : index
    %8 = vector.load %arg6[%c0_10, %c0_11] : memref<8x1xf32, #tpu.memory_space<vmem>>, vector<8x1xf32>
    %9 = vector.broadcast %7 : vector<8x1xf32> to vector<8x8xf32>
    %10 = arith.mulf %3, %9 : vector<8x8xf32>
    %11 = vector.broadcast %8 : vector<8x1xf32> to vector<8x8xf32>
    %12 = arith.addf %10, %11 : vector<8x8xf32>
    %cst_12 = arith.constant 0.000000e+00 : f32
    %13 = vector.broadcast %cst_12 : f32 to vector<8x8xf32>
    %14 = arith.maximumf %12, %13 : vector<8x8xf32>
    %15 = vector.broadcast %7 : vector<8x1xf32> to vector<8x8xf32>
    %16 = arith.mulf %6, %15 : vector<8x8xf32>
    %17 = vector.broadcast %8 : vector<8x1xf32> to vector<8x8xf32>
    %18 = arith.addf %16, %17 : vector<8x8xf32>
    %cst_13 = arith.constant 0.000000e+00 : f32
    %19 = vector.broadcast %cst_13 : f32 to vector<8x8xf32>
    %20 = arith.maximumf %18, %19 : vector<8x8xf32>
    %21 = arith.maximumf %14, %20 : vector<8x8xf32>
    %c0_14 = arith.constant 0 : index
    %c0_15 = arith.constant 0 : index
    %c0_16 = arith.constant 0 : index
    %22 = vector.load %arg7[%c0_14, %c0_15, %c0_16] : memref<1x8x8xf32, #tpu.memory_space<vmem>>, vector<1x8x8xf32>
    %23 = vector.shape_cast %22 : vector<1x8x8xf32> to vector<8x8xf32>
    %24 = vector.shape_cast %21 : vector<8x8xf32> to vector<1x8x8xf32>
    tpu.vector_store %arg7[%c0_14, %c0_15, %c0_16], %24 {strides = array<i32>} : memref<1x8x8xf32, #tpu.memory_space<vmem>>, vector<1x8x8xf32>,
    return
  }
  func.func @transform_0(%arg0: i32, %arg1: i32) -> (i32, i32) {
    %c0_i32 = arith.constant 0 : i32
    %c0_i32_0 = arith.constant 0 : i32
    %c0_i32_1 = arith.constant 0 : i32
    return %c0_i32, %c0_i32_0 : i32, i32
  }
  func.func @transform_1(%arg0: i32, %arg1: i32) -> (i32, i32, i32) {
    %c0_i32 = arith.constant 0 : i32
    %c0_i32_0 = arith.constant 0 : i32
    return %arg0, %c0_i32, %arg1 : i32, i32, i32
  }
  func.func @transform_2(%arg0: i32, %arg1: i32) -> (i32, i32, i32) {
    %c0_i32 = arith.constant 0 : i32
    %c0_i32_0 = arith.constant 0 : i32
    return %arg0, %c0_i32, %arg1 : i32, i32, i32
  }
  func.func @transform_3(%arg0: i32, %arg1: i32) -> (i32, i32) {
    %c0_i32 = arith.constant 0 : i32
    %c0_i32_0 = arith.constant 0 : i32
    %c0_i32_1 = arith.constant 0 : i32
    return %c0_i32, %c0_i32_0 : i32, i32
  }
  func.func @transform_4(%arg0: i32, %arg1: i32) -> (i32, i32) {
    %c0_i32 = arith.constant 0 : i32
    %c0_i32_0 = arith.constant 0 : i32
    %c0_i32_1 = arith.constant 0 : i32
    return %c0_i32, %c0_i32_0 : i32, i32
  }
  func.func @transform_5(%arg0: i32, %arg1: i32) -> (i32, i32, i32) {
    %c0_i32 = arith.constant 0 : i32
    %c0_i32_0 = arith.constant 0 : i32
    return %arg0, %c0_i32, %arg1 : i32, i32, i32
  }
}

</mosaic_0001>

<llo_original>
// kernel: sandwich_forward.3
$region0: #{sandwich_forward.3}
  #allocation0 [shape = 'u32[]', space=smem, size = 0x4, offset = 0x4, fixed_abs, tag = 'smem constant byte address 0x4 - core index']
  #allocation1 [shape = 'u32[144,128]{1,0:T(1,128)}', space=vmem, size = 0x12000, scoped, tag = 'internal scratch']
  %s0 = inlined_call_operand.vmem [shape: bf16[8,12], index: 0, kind: input, shape index: {}]
  %s1 = inlined_call_operand.vmem [shape: bf16[2,12,8], index: 1, kind: input, shape index: {}]
  %s2 = inlined_call_operand.vmem [shape: bf16[2,12,8], index: 2, kind: input, shape index: {}]
  %s3 = inlined_call_operand.vmem [shape: f32[8,1], index: 3, kind: input, shape index: {}]
  %s4 = inlined_call_operand.vmem [shape: f32[8,1], index: 4, kind: input, shape index: {}]
  %s5 = inlined_call_operand.hbm [shape: f32[2,8,8], index: 5, kind: output, shape index: {}]
  %s6 = sld [smem:[#allocation0]]
  $region53: #{sandwich_forward.3} parent=0
    _
  %s8 = ssub.s32 1, %s6
  %s9 = scalar_select 0, %s8, %s6
  $region1: #{sandwich_forward.3} parent=0
    #allocation2 [shape = 'u8[8192]{0}', space=vmem, size = 0x2000, scoped, tag = 'output window, operand 0']
    #allocation3 [shape = 's32[2]{0}', space=sflag, size = 0x8, scoped, tag = 'scoped memory for sandwich_forward.3']
    %10 = vsyncpa [#allocation3], 0
    %s11 = scalar_lea.sflag [#allocation3], 1
    %12 = vsyncpa %s11, 0
    loop: start=0, step=1, limit=4
    $region2: #{sandwich_forward.3} parent=1 // loop_pre_header
      _
    $region3: #{sandwich_forward.3} parent=1 // loop_header
      %s14 = sphi 0, %s18
      %p15 = scmp.ge.s32.totalorder %s14, 4
      %s21 = sphi 0, %s33
      %s22 = sphi 0, %s29
      %s23 = sphi 0, %s21
      %s24 = sphi 0, %s22
      %s25 = sphi 0, %s23
      %s26 = sphi 0, %s24
      %s34 = sphi 0, %s34
      %s36 = sphi 0, %s34
      %s37 = sphi 0, %s36
      %s51 = sphi 0, %s37
      %s59 = sphi 0, %s61
      %s62 = sphi 0, %s59
      %s63 = sphi 0, %s62
      %s79 = sphi 0, %s63
      %s87 = sphi 0, %s89
      %s90 = sphi 0, %s87
      %s91 = sphi 0, %s90
      %s107 = sphi 0, %s91
      %s111 = sphi 0, %s111
      %s113 = sphi 0, %s111
      %s114 = sphi 0, %s113
      %s128 = sphi 0, %s114
      %s132 = sphi 0, %s132
      %s134 = sphi 0, %s132
      %s135 = sphi 0, %s134
      %s149 = sphi 0, %s135
      %s157 = sphi 0, %s159
      %s160 = sphi 0, %s157
      %s161 = sphi 0, %s160
      %s177 = sphi 0, %s161
    $region4: #{sandwich_forward.3} parent=1 // loop_header_branch
      %17 = sbr.rel (%p15) target = $region8
    $region5: #{sandwich_forward.3} parent=1 // loop_body
      %s19 = ssub.s32 %s14, 1
      %s20 = ssub.s32 %s14, 2
      %s27 = sadd.s32 1, %s22
      %p28 = scmp.ge.s32.totalorder %s27, 1
      %s29 = scalar_select %p28, 0, %s27
      %s30 = sadd.s32 1, %s21
      %s31 = scalar_select %p28, %s30, %s21
      %p32 = scmp.ge.s32.totalorder %s31, 2
      %s33 = scalar_select %p32, 0, %s31
      %s35 = sadd.s32 %s34, 1
      %p38 = scmp.eq.s32.totalorder %s14, 1
      %p39 = scmp.ne.s32.totalorder %s34, %s36
      %p40 = scmp.eq.s32.totalorder %s14, 0
      %p41 = por %p39, %p40
      %p42 = scmp.ne.s32.totalorder %s34, %s36
      %p43 = scmp.eq.s32.totalorder %s19, 1
      %p44 = por %p42, %p43
      %p45 = scmp.ne.s32.totalorder %s36, %s37
      %p46 = scmp.eq.s32.totalorder %s19, 0
      %p47 = por %p45, %p46
      %p48 = scmp.ne.s32.totalorder %s36, %s37
      %p49 = scmp.eq.s32.totalorder %s20, 1
      %p50 = por %p48, %p49
      %p52 = scmp.ne.s32.totalorder %s37, %s51
      %p53 = scmp.eq.s32.totalorder %s20, 0
      %p54 = por %p52, %p53
      %s55 = ssub.s32 %s21, %s33
      %s56 = ssub.s32 %s22, %s29
      %s57 = sor.u32 %s55, %s56
      %p58 = scmp.eq.s32.totalorder %s57, 0
      %s60 = sadd.s32 %s59, 1
      %s61 = scalar_select %p58, %s59, %s60
      %p64 = pneg %p58
      %p65 = scmp.eq.s32.totalorder %s14, 1
      %p66 = por %p64, %p65
      %p67 = scmp.ne.s32.totalorder %s59, %s62
      %p68 = scmp.eq.s32.totalorder %s14, 0
      %p69 = por %p67, %p68
      %p70 = scmp.ne.s32.totalorder %s59, %s62
      %p71 = scmp.eq.s32.totalorder %s19, 1
      %p72 = por %p70, %p71
      %p73 = scmp.ne.s32.totalorder %s62, %s63
      %p74 = scmp.eq.s32.totalorder %s19, 0
      %p75 = por %p73, %p74
      %p76 = scmp.ne.s32.totalorder %s62, %s63
      %p77 = scmp.eq.s32.totalorder %s20, 1
      %p78 = por %p76, %p77
      %p80 = scmp.ne.s32.totalorder %s63, %s79
      %p81 = scmp.eq.s32.totalorder %s20, 0
      %p82 = por %p80, %p81
      %s83 = ssub.s32 %s21, %s33
      %s84 = ssub.s32 %s22, %s29
      %s85 = sor.u32 %s83, %s84
      %p86 = scmp.eq.s32.totalorder %s85, 0
      %s88 = sadd.s32 %s87, 1
      %s89 = scalar_select %p86, %s87, %s88
      %p92 = pneg %p86
      %p93 = scmp.eq.s32.totalorder %s14, 1
      %p94 = por %p92, %p93
      %p95 = scmp.ne.s32.totalorder %s87, %s90
      %p96 = scmp.eq.s32.totalorder %s14, 0
      %p97 = por %p95, %p96
      %p98 = scmp.ne.s32.totalorder %s87, %s90
      %p99 = scmp.eq.s32.totalorder %s19, 1
      %p100 = por %p98, %p99
      %p101 = scmp.ne.s32.totalorder %s90, %s91
      %p102 = scmp.eq.s32.totalorder %s19, 0
      %p103 = por %p101, %p102
      %p104 = scmp.ne.s32.totalorder %s90, %s91
      %p105 = scmp.eq.s32.totalorder %s20, 1
      %p106 = por %p104, %p105
      %p108 = scmp.ne.s32.totalorder %s91, %s107
      %p109 = scmp.eq.s32.totalorder %s20, 0
      %p110 = por %p108, %p109
      %s112 = sadd.s32 %s111, 1
      %p115 = scmp.eq.s32.totalorder %s14, 1
      %p116 = scmp.ne.s32.totalorder %s111, %s113
      %p117 = scmp.eq.s32.totalorder %s14, 0
      %p118 = por %p116, %p117
      %p119 = scmp.ne.s32.totalorder %s111, %s113
      %p120 = scmp.eq.s32.totalorder %s19, 1
      %p121 = por %p119, %p120
      %p122 = scmp.ne.s32.totalorder %s113, %s114
      %p123 = scmp.eq.s32.totalorder %s19, 0
      %p124 = por %p122, %p123
      %p125 = scmp.ne.s32.totalorder %s113, %s114
      %p126 = scmp.eq.s32.totalorder %s20, 1
      %p127 = por %p125, %p126
      %p129 = scmp.ne.s32.totalorder %s114, %s128
      %p130 = scmp.eq.s32.totalorder %s20, 0
      %p131 = por %p129, %p130
      %s133 = sadd.s32 %s132, 1
      %p136 = scmp.eq.s32.totalorder %s14, 1
      %p137 = scmp.ne.s32.totalorder %s132, %s134
      %p138 = scmp.eq.s32.totalorder %s14, 0
      %p139 = por %p137, %p138
      %p140 = scmp.ne.s32.totalorder %s132, %s134
      %p141 = scmp.eq.s32.totalorder %s19, 1
      %p142 = por %p140, %p141
      %p143 = scmp.ne.s32.totalorder %s134, %s135
      %p144 = scmp.eq.s32.totalorder %s19, 0
      %p145 = por %p143, %p144
      %p146 = scmp.ne.s32.totalorder %s134, %s135
      %p147 = scmp.eq.s32.totalorder %s20, 1
      %p148 = por %p146, %p147
      %p150 = scmp.ne.s32.totalorder %s135, %s149
      %p151 = scmp.eq.s32.totalorder %s20, 0
      %p152 = por %p150, %p151
      %s153 = ssub.s32 %s21, %s33
      %s154 = ssub.s32 %s22, %s29
      %s155 = sor.u32 %s153, %s154
      %p156 = scmp.eq.s32.totalorder %s155, 0
      %s158 = sadd.s32 %s157, 1
      %s159 = scalar_select %p156, %s157, %s158
      %p162 = pneg %p156
      %p163 = scmp.eq.s32.totalorder %s14, 1
      %p164 = por %p162, %p163
      %p165 = scmp.ne.s32.totalorder %s157, %s160
      %p166 = scmp.eq.s32.totalorder %s14, 0
      %p167 = por %p165, %p166
      %p168 = scmp.ne.s32.totalorder %s157, %s160
      %p169 = scmp.eq.s32.totalorder %s19, 1
      %p170 = por %p168, %p169
      %p171 = scmp.ne.s32.totalorder %s160, %s161
      %p172 = scmp.eq.s32.totalorder %s19, 0
      %p173 = por %p171, %p172
      %p174 = scmp.ne.s32.totalorder %s160, %s161
      %p175 = scmp.eq.s32.totalorder %s20, 1
      %p176 = por %p174, %p175
      %p178 = scmp.ne.s32.totalorder %s161, %s177
      %p179 = scmp.eq.s32.totalorder %s20, 0
      %p180 = por %p178, %p179
      %p181 = scmp.le.s32.totalorder 1, %s14
      %p182 = scmp.lt.s32.totalorder %s14, 3
      %p183 = pnand %p181, %p182
      %p184 = pneg %p183
      // Predicated region
      $region9: #{sandwich_forward.3} parent=5 // pred_check
        _
      $region10: #{sandwich_forward.3} parent=5 // pred_check_branch
        %186 = sbr.rel (%p183) target = $region12
      $region11: #{sandwich_forward.3} parent=5 // pred_region
        %s187 = ssub.s32 %s14, 1
        // Predicated region
        $region13: #{sandwich_forward.3} parent=11 // pred_check
          %p188 = pneg %p47
        $region14: #{sandwich_forward.3} parent=11 // pred_check_branch
          %190 = sbr.rel (%p188) target = $region16
        $region15: #{sandwich_forward.3} parent=11 // pred_region
          _
        $region16: #{sandwich_forward.3} parent=11 // pred_fallthru
          _
        // Predicated region
        $region17: #{sandwich_forward.3} parent=11 // pred_check
          %p191 = pneg %p124
        $region18: #{sandwich_forward.3} parent=11 // pred_check_branch
          %193 = sbr.rel (%p191) target = $region20
        $region19: #{sandwich_forward.3} parent=11 // pred_region
          _
        $region20: #{sandwich_forward.3} parent=11 // pred_fallthru
          _
        // Predicated region
        $region21: #{sandwich_forward.3} parent=11 // pred_check
          %p194 = pneg %p145
        $region22: #{sandwich_forward.3} parent=11 // pred_check_branch
          %196 = sbr.rel (%p194) target = $region24
        $region23: #{sandwich_forward.3} parent=11 // pred_region
          _
        $region24: #{sandwich_forward.3} parent=11 // pred_fallthru
          _
      $region12: #{sandwich_forward.3} parent=5 // pred_fallthru
        _
      %p197 = scmp.lt.s32.totalorder %s14, 2
      // Predicated region
      $region25: #{sandwich_forward.3} parent=5 // pred_check
        %p198 = pneg %p197
      $region26: #{sandwich_forward.3} parent=5 // pred_check_branch
        %200 = sbr.rel (%p198) target = $region28
      $region27: #{sandwich_forward.3} parent=5 // pred_region
        // Predicated region
        $region29: #{sandwich_forward.3} parent=27 // pred_check
          %p201 = pneg %p69
        $region30: #{sandwich_forward.3} parent=27 // pred_check_branch
          %203 = sbr.rel (%p201) target = $region32
        $region31: #{sandwich_forward.3} parent=27 // pred_region
          %p204 = scmp.lt.s32.totalorder %s21, 1
          %s205 = scalar_select %p204, %s21, 1
          %p206 = scmp.lt.s32.totalorder %s22, 0
          %s207 = scalar_select %p206, %s22, 0
          %s208 = smul.addr %s205, 2
          %s209 = sadd.s32 %s207, %s208
          %s210 = smul.addr %s209, 4
          %s211 = scalar_lea.vmem %s1, %s210
        $region32: #{sandwich_forward.3} parent=27 // pred_fallthru
          _
        // Predicated region
        $region33: #{sandwich_forward.3} parent=27 // pred_check
          %p212 = pneg %p97
        $region34: #{sandwich_forward.3} parent=27 // pred_check_branch
          %214 = sbr.rel (%p212) target = $region36
        $region35: #{sandwich_forward.3} parent=27 // pred_region
          %p215 = scmp.lt.s32.totalorder %s21, 1
          %s216 = scalar_select %p215, %s21, 1
          %p217 = scmp.lt.s32.totalorder %s22, 0
          %s218 = scalar_select %p217, %s22, 0
          %s219 = smul.addr %s216, 2
          %s220 = sadd.s32 %s218, %s219
          %s221 = smul.addr %s220, 4
          %s222 = scalar_lea.vmem %s2, %s221
        $region36: #{sandwich_forward.3} parent=27 // pred_fallthru
          _
      $region28: #{sandwich_forward.3} parent=5 // pred_fallthru
        _
      %p223 = scmp.le.s32.totalorder 1, %s14
      %p224 = scmp.lt.s32.totalorder %s14, 3
      %p225 = pnand %p223, %p224
      %p226 = pneg %p225
      // Predicated region
      $region37: #{sandwich_forward.3} parent=5 // pred_check
        _
      $region38: #{sandwich_forward.3} parent=5 // pred_check_branch
        %228 = sbr.rel (%p225) target = $region40
      $region39: #{sandwich_forward.3} parent=5 // pred_region
        %s229 = ssub.s32 %s14, 1
        %p230 = pneg %p47
        %p231 = pneg %p44
        %p232 = scmp.lt.s32.totalorder %s23, 1
        %s233 = scalar_select %p232, %s23, 1
        %p234 = scmp.lt.s32.totalorder %s24, 0
        %s235 = scalar_select %p234, %s24, 0
        %s236 = smul.addr %s233, 2
        %s237 = sadd.s32 %s235, %s236
        %s238 = smul.addr %s237, 4
        %s239 = scalar_lea.vmem %s1, %s238
        %p240 = pneg %p75
        %p241 = pneg %p72
        %p242 = scmp.lt.s32.totalorder %s23, 1
        %s243 = scalar_select %p242, %s23, 1
        %p244 = scmp.lt.s32.totalorder %s24, 0
        %s245 = scalar_select %p244, %s24, 0
        %s246 = smul.addr %s243, 2
        %s247 = sadd.s32 %s245, %s246
        %s248 = smul.addr %s247, 4
        %s249 = scalar_lea.vmem %s2, %s248
        %p250 = pneg %p103
        %p251 = pneg %p100
        %p252 = pneg %p124
        %p253 = pneg %p121
        %p254 = pneg %p145
        %p255 = pneg %p142
        %p256 = pneg %p173
        %p257 = pneg %p170
        %s258 = sand.u32 %s160, 1
        %s259 = scalar_lea.sflag [#allocation3], %s258
        %s260 = sand.u32 %s160, 1
        %s261 = smul.addr %s260, 8
        %s262 = scalar_lea.vmem [#allocation2], %s261
        %p263 = scmp.lt.s32.totalorder %s23, 1
        %s264 = scalar_select %p263, %s23, 1
        %p265 = scmp.lt.s32.totalorder %s24, 0
        %s266 = scalar_select %p265, %s24, 0
        %s267 = smul.addr %s264, 2
        %s268 = sadd.s32 %s266, %s267
        %s269 = smul.addr %s268, 4
        %s270 = scalar_lea.vmem %s1, %s269
        %p271 = scmp.lt.s32.totalorder %s23, 1
        %s272 = scalar_select %p271, %s23, 1
        %p273 = scmp.lt.s32.totalorder %s24, 0
        %s274 = scalar_select %p273, %s24, 0
        %s275 = smul.addr %s272, 2
        %s276 = sadd.s32 %s274, %s275
        %s277 = smul.addr %s276, 4
        %s278 = scalar_lea.vmem %s2, %s277
        %v280 = vld [vmem:[%s0] sm:$0xf]
        %v281 = vld [vmem:[%s270] sm:$0xf]
        %v282 = vld [vmem:[%s270 + $0x4] sm:$0x3]
        %v285 = vunpack.c.l.b16 %v281
        %v286 = vunpack.c.l.b16 %v282
        %v287 = vpack.c.b16 %v286, %v285
        %vm288 = vcmask 97280
        %v290 = vsel %vm288, %v280, 0
        %vm292 = vcmask 1045504
        %v294 = vsel %vm292, %v287, 0
        %296 = vmatprep.subr.bf16.mxu0 0
        %297 = vmatpush1.bf16.msra.mxu0 %v294
        %298 = vmatprep.subr.bf16.mxu0 0
        %299 = vmatpush1.bf16.msra.mxu0 0
        %300 = vmatprep.subr.bf16.mxu0 0
        %301 = vmatpush1.bf16.msra.mxu0 0
        %302 = vmatprep.subr.bf16.mxu0 0
        %303 = vmatpush1.bf16.msra.mxu0 0
        %304 = vmatprep.subr.bf16.mxu0 0
        %305 = vmatpush1.bf16.msra.mxu0 0
        %306 = vmatprep.subr.bf16.mxu0 0
        %307 = vmatpush1.bf16.msra.mxu0 0
        %308 = vmatprep.subr.bf16.mxu0 0
        %309 = vmatpush1.bf16.msra.mxu0 0
        %310 = vmatprep.subr.bf16.mxu0 0
        %311 = vmatpush1.bf16.msra.mxu0 0
        %312 = vmatprep.subr.bf16.mxu0 0
        %313 = vmatpush1.bf16.msra.mxu0 0
        %314 = vmatprep.subr.bf16.mxu0 0
        %315 = vmatpush1.bf16.msra.mxu0 0
        %316 = vmatprep.subr.bf16.mxu0 0
        %317 = vmatpush1.bf16.msra.mxu0 0
        %318 = vmatprep.subr.bf16.mxu0 0
        %319 = vmatpush1.bf16.msra.mxu0 0
        %320 = vmatprep.subr.bf16.mxu0 0
        %321 = vmatpush1.bf16.msra.mxu0 0
        %322 = vmatprep.subr.bf16.mxu0 0
        %323 = vmatpush1.bf16.msra.mxu0 0
        %324 = vmatprep.subr.bf16.mxu0 0
        %325 = vmatpush1.bf16.msra.mxu0 0
        %326 = vmatprep.subr.bf16.mxu0 0
        %327 = vmatpush1.bf16.msra.mxu0 0
        %328 = vmatprep.mubr.bf16.mxu0 0
        %329 = vmatmul.mubr.bf16.gmra.mrb[0].mxu0 %v290
        %v330 = vpop.f32.mrb[0].mxu0
        %v331 = vadd.f32 0.0, %v330
        %v332 = vpop.f32.mrb[0].mxu0
        %v333 = vpop.f32.mrb[0].mxu0
        %v334 = vpop.f32.mrb[0].mxu0
        %335 = vdwg.mxu0
        %v336 = vld [vmem:[%s278] sm:$0xf]
        %v337 = vld [vmem:[%s278 + $0x4] sm:$0x3]
        %v340 = vunpack.c.l.b16 %v336
        %v341 = vunpack.c.l.b16 %v337
        %v342 = vpack.c.b16 %v341, %v340
        %v344 = vsel %vm292, %v342, 0
        %346 = vmatprep.subr.bf16.mxu0 0
        %347 = vmatpush1.bf16.msra.mxu0 %v344
        %348 = vmatprep.subr.bf16.mxu0 0
        %349 = vmatpush1.bf16.msra.mxu0 0
        %350 = vmatprep.subr.bf16.mxu0 0
        %351 = vmatpush1.bf16.msra.mxu0 0
        %352 = vmatprep.subr.bf16.mxu0 0
        %353 = vmatpush1.bf16.msra.mxu0 0
        %354 = vmatprep.subr.bf16.mxu0 0
        %355 = vmatpush1.bf16.msra.mxu0 0
        %356 = vmatprep.subr.bf16.mxu0 0
        %357 = vmatpush1.bf16.msra.mxu0 0
        %358 = vmatprep.subr.bf16.mxu0 0
        %359 = vmatpush1.bf16.msra.mxu0 0
        %360 = vmatprep.subr.bf16.mxu0 0
        %361 = vmatpush1.bf16.msra.mxu0 0
        %362 = vmatprep.subr.bf16.mxu0 0
        %363 = vmatpush1.bf16.msra.mxu0 0
        %364 = vmatprep.subr.bf16.mxu0 0
        %365 = vmatpush1.bf16.msra.mxu0 0
        %366 = vmatprep.subr.bf16.mxu0 0
        %367 = vmatpush1.bf16.msra.mxu0 0
        %368 = vmatprep.subr.bf16.mxu0 0
        %369 = vmatpush1.bf16.msra.mxu0 0
        %370 = vmatprep.subr.bf16.mxu0 0
        %371 = vmatpush1.bf16.msra.mxu0 0
        %372 = vmatprep.subr.bf16.mxu0 0
        %373 = vmatpush1.bf16.msra.mxu0 0
        %374 = vmatprep.subr.bf16.mxu0 0
        %375 = vmatpush1.bf16.msra.mxu0 0
        %376 = vmatprep.subr.bf16.mxu0 0
        %377 = vmatpush1.bf16.msra.mxu0 0
        %378 = vmatprep.mubr.bf16.mxu0 0
        %379 = vmatmul.mubr.bf16.gmra.mrb[0].mxu0 %v290
        %v380 = vpop.f32.mrb[0].mxu0
        %v381 = vadd.f32 0.0, %v380
        %v382 = vpop.f32.mrb[0].mxu0
        %v383 = vpop.f32.mrb[0].mxu0
        %v384 = vpop.f32.mrb[0].mxu0
        %385 = vdwg.mxu0
        %v386 = vld [vmem:[%s3] sm:$0xff]
        %v387 = vld [vmem:[%s4] sm:$0xff]
        %389 = vset.pattern.permute.xlu0 0
        %390 = vperm.xlu0 %389, %v386
        %v391 = vpop.permute.xlu0 %390
        %v393 = vmul.f32 %v331, %v391
        %395 = vset.pattern.permute.xlu0 0
        %396 = vperm.xlu0 %395, %v387
        %v397 = vpop.permute.xlu0 %396
        %v399 = vadd.f32 %v393, %v397
        %v400 = vmax.f32 %v399, 0.0
        %v401 = vmul.f32 %v381, %v391
        %v402 = vadd.f32 %v401, %v397
        %v403 = vmax.f32 %v402, 0.0
        %v404 = vmax.f32 %v400, %v403
        %vm405 = vcmask 64512
        %406 = vst.msk [vmem:[%s262] sm:$0xff] %vm405, %v404
        %s407 = sand.u32 %s160, 1
        %s408 = scalar_lea.sflag [#allocation3], %s407
        %s409 = sand.u32 %s160, 1
        %s410 = smul.addr %s409, 8
        %s411 = scalar_lea.vmem [#allocation2], %s410
        // Predicated region
        $region41: #{sandwich_forward.3} parent=39 // pred_check
          %p412 = pneg %p170
        $region42: #{sandwich_forward.3} parent=39 // pred_check_branch
          %414 = sbr.rel (%p412) target = $region44
        $region43: #{sandwich_forward.3} parent=39 // pred_region
          %s416 = ssub.s32 128, 128
          %417 = vsyncadd %s408, %s416
          %s418 = sadd.s32 %s24, %s23
          %s419 = smul.addr %s418, 128
          %s420 = scalar_lea.hbm %s5, %s419
          %s422 = sshll.u32 %s411, 4
          %s423 = int_to_ptr.vmem [resolvable:$true] %s422
          %425 = dma.vmem_to_hbm [thread:$0]  %s423, 128, %s420, %s408
        $region44: #{sandwich_forward.3} parent=39 // pred_fallthru
          _
      $region40: #{sandwich_forward.3} parent=5 // pred_fallthru
        _
      %p426 = scmp.le.s32.totalorder 2, %s14
      // Predicated region
      $region45: #{sandwich_forward.3} parent=5 // pred_check
        %p427 = pneg %p426
      $region46: #{sandwich_forward.3} parent=5 // pred_check_branch
        %429 = sbr.rel (%p427) target = $region48
      $region47: #{sandwich_forward.3} parent=5 // pred_region
        %s430 = ssub.s32 %s14, 2
        // Predicated region
        $region49: #{sandwich_forward.3} parent=47 // pred_check
          %p431 = pneg %p176
        $region50: #{sandwich_forward.3} parent=47 // pred_check_branch
          %433 = sbr.rel (%p431) target = $region52
        $region51: #{sandwich_forward.3} parent=47 // pred_region
          %s434 = sand.u32 %s161, 1
          %s435 = scalar_lea.sflag [#allocation3], %s434
          %s436 = sand.u32 %s161, 1
          %s437 = smul.addr %s436, 8
          %s438 = scalar_lea.vmem [#allocation2], %s437
          %439 = dma.done %s435, 128
        $region52: #{sandwich_forward.3} parent=47 // pred_fallthru
          _
      $region48: #{sandwich_forward.3} parent=5 // pred_fallthru
        _
    $region6: #{sandwich_forward.3} parent=1 // loop_footer
      %s18 = sadd.s32 1, %s14
    $region7: #{sandwich_forward.3} parent=1 // loop_footer_branch
      %13 = sbr.rel target = $region3
    $region8: #{sandwich_forward.3} parent=1 // loop_exit
      _
    %440 = vsyncpa [#allocation3], 1
    %s441 = scalar_lea.sflag [#allocation3], 1
    %442 = vsyncpa %s441, 1

// kernel: sandwich_forward.2
$region0: #{sandwich_forward.2}
  #allocation0 [shape = 'u32[]', space=smem, size = 0x4, offset = 0x4, fixed_abs, tag = 'smem constant byte address 0x4 - core index']
  #allocation1 [shape = 'u32[144,128]{1,0:T(1,128)}', space=vmem, size = 0x12000, scoped, tag = 'internal scratch']
  %s0 = inlined_call_operand.vmem [shape: bf16[8,12], index: 0, kind: input, shape index: {}]
  %s1 = inlined_call_operand.vmem [shape: bf16[2,12,8], index: 1, kind: input, shape index: {}]
  %s2 = inlined_call_operand.vmem [shape: bf16[2,12,8], index: 2, kind: input, shape index: {}]
  %s3 = inlined_call_operand.vmem [shape: f32[2,8,2], index: 3, kind: output, shape index: {}]
  %s4 = sld [smem:[#allocation0]]
  $region49: #{sandwich_forward.2} parent=0
    _
  %s6 = ssub.s32 1, %s4
  %s7 = scalar_select 0, %s6, %s4
  loop: start=0, step=1, limit=4
  $region2: #{sandwich_forward.2} parent=0 // loop_pre_header
    _
  $region3: #{sandwich_forward.2} parent=0 // loop_header
    %s9 = sphi 0, %s13
    %p10 = scmp.ge.s32.totalorder %s9, 4
    %s16 = sphi 0, %s28
    %s17 = sphi 0, %s24
    %s18 = sphi 0, %s16
    %s19 = sphi 0, %s17
    %s20 = sphi 0, %s18
    %s21 = sphi 0, %s19
    %s29 = sphi 0, %s29
    %s31 = sphi 0, %s29
    %s32 = sphi 0, %s31
    %s46 = sphi 0, %s32
    %s54 = sphi 0, %s56
    %s57 = sphi 0, %s54
    %s58 = sphi 0, %s57
    %s74 = sphi 0, %s58
    %s82 = sphi 0, %s84
    %s85 = sphi 0, %s82
    %s86 = sphi 0, %s85
    %s102 = sphi 0, %s86
    %s108 = sphi 0, %s110
    %s111 = sphi 0, %s108
    %s112 = sphi 0, %s111
    %s128 = sphi 0, %s112
  $region4: #{sandwich_forward.2} parent=0 // loop_header_branch
    %12 = sbr.rel (%p10) target = $region8
  $region5: #{sandwich_forward.2} parent=0 // loop_body
    %s14 = ssub.s32 %s9, 1
    %s15 = ssub.s32 %s9, 2
    %s22 = sadd.s32 1, %s17
    %p23 = scmp.ge.s32.totalorder %s22, 1
    %s24 = scalar_select %p23, 0, %s22
    %s25 = sadd.s32 1, %s16
    %s26 = scalar_select %p23, %s25, %s16
    %p27 = scmp.ge.s32.totalorder %s26, 2
    %s28 = scalar_select %p27, 0, %s26
    %s30 = sadd.s32 %s29, 1
    %p33 = scmp.eq.s32.totalorder %s9, 1
    %p34 = scmp.ne.s32.totalorder %s29, %s31
    %p35 = scmp.eq.s32.totalorder %s9, 0
    %p36 = por %p34, %p35
    %p37 = scmp.ne.s32.totalorder %s29, %s31
    %p38 = scmp.eq.s32.totalorder %s14, 1
    %p39 = por %p37, %p38
    %p40 = scmp.ne.s32.totalorder %s31, %s32
    %p41 = scmp.eq.s32.totalorder %s14, 0
    %p42 = por %p40, %p41
    %p43 = scmp.ne.s32.totalorder %s31, %s32
    %p44 = scmp.eq.s32.totalorder %s15, 1
    %p45 = por %p43, %p44
    %p47 = scmp.ne.s32.totalorder %s32, %s46
    %p48 = scmp.eq.s32.totalorder %s15, 0
    %p49 = por %p47, %p48
    %s50 = ssub.s32 %s16, %s28
    %s51 = ssub.s32 %s17, %s24
    %s52 = sor.u32 %s50, %s51
    %p53 = scmp.eq.s32.totalorder %s52, 0
    %s55 = sadd.s32 %s54, 1
    %s56 = scalar_select %p53, %s54, %s55
    %p59 = pneg %p53
    %p60 = scmp.eq.s32.totalorder %s9, 1
    %p61 = por %p59, %p60
    %p62 = scmp.ne.s32.totalorder %s54, %s57
    %p63 = scmp.eq.s32.totalorder %s9, 0
    %p64 = por %p62, %p63
    %p65 = scmp.ne.s32.totalorder %s54, %s57
    %p66 = scmp.eq.s32.totalorder %s14, 1
    %p67 = por %p65, %p66
    %p68 = scmp.ne.s32.totalorder %s57, %s58
    %p69 = scmp.eq.s32.totalorder %s14, 0
    %p70 = por %p68, %p69
    %p71 = scmp.ne.s32.totalorder %s57, %s58
    %p72 = scmp.eq.s32.totalorder %s15, 1
    %p73 = por %p71, %p72
    %p75 = scmp.ne.s32.totalorder %s58, %s74
    %p76 = scmp.eq.s32.totalorder %s15, 0
    %p77 = por %p75, %p76
    %s78 = ssub.s32 %s16, %s28
    %s79 = ssub.s32 %s17, %s24
    %s80 = sor.u32 %s78, %s79
    %p81 = scmp.eq.s32.totalorder %s80, 0
    %s83 = sadd.s32 %s82, 1
    %s84 = scalar_select %p81, %s82, %s83
    %p87 = pneg %p81
    %p88 = scmp.eq.s32.totalorder %s9, 1
    %p89 = por %p87, %p88
    %p90 = scmp.ne.s32.totalorder %s82, %s85
    %p91 = scmp.eq.s32.totalorder %s9, 0
    %p92 = por %p90, %p91
    %p93 = scmp.ne.s32.totalorder %s82, %s85
    %p94 = scmp.eq.s32.totalorder %s14, 1
    %p95 = por %p93, %p94
    %p96 = scmp.ne.s32.totalorder %s85, %s86
    %p97 = scmp.eq.s32.totalorder %s14, 0
    %p98 = por %p96, %p97
    %p99 = scmp.ne.s32.totalorder %s85, %s86
    %p100 = scmp.eq.s32.totalorder %s15, 1
    %p101 = por %p99, %p100
    %p103 = scmp.ne.s32.totalorder %s86, %s102
    %p104 = scmp.eq.s32.totalorder %s15, 0
    %p105 = por %p103, %p104
    %s106 = ssub.s32 %s16, %s28
    %p107 = scmp.eq.s32.totalorder %s106, 0
    %s109 = sadd.s32 %s108, 1
    %s110 = scalar_select %p107, %s108, %s109
    %p113 = pneg %p107
    %p114 = scmp.eq.s32.totalorder %s9, 1
    %p115 = por %p113, %p114
    %p116 = scmp.ne.s32.totalorder %s108, %s111
    %p117 = scmp.eq.s32.totalorder %s9, 0
    %p118 = por %p116, %p117
    %p119 = scmp.ne.s32.totalorder %s108, %s111
    %p120 = scmp.eq.s32.totalorder %s14, 1
    %p121 = por %p119, %p120
    %p122 = scmp.ne.s32.totalorder %s111, %s112
    %p123 = scmp.eq.s32.totalorder %s14, 0
    %p124 = por %p122, %p123
    %p125 = scmp.ne.s32.totalorder %s111, %s112
    %p126 = scmp.eq.s32.totalorder %s15, 1
    %p127 = por %p125, %p126
    %p129 = scmp.ne.s32.totalorder %s112, %s128
    %p130 = scmp.eq.s32.totalorder %s15, 0
    %p131 = por %p129, %p130
    %p132 = scmp.le.s32.totalorder 1, %s9
    %p133 = scmp.lt.s32.totalorder %s9, 3
    %p134 = pnand %p132, %p133
    %p135 = pneg %p134
    // Predicated region
    $region9: #{sandwich_forward.2} parent=5 // pred_check
      _
    $region10: #{sandwich_forward.2} parent=5 // pred_check_branch
      %137 = sbr.rel (%p134) target = $region12
    $region11: #{sandwich_forward.2} parent=5 // pred_region
      %s138 = ssub.s32 %s9, 1
      // Predicated region
      $region13: #{sandwich_forward.2} parent=11 // pred_check
        %p139 = pneg %p42
      $region14: #{sandwich_forward.2} parent=11 // pred_check_branch
        %141 = sbr.rel (%p139) target = $region16
      $region15: #{sandwich_forward.2} parent=11 // pred_region
        _
      $region16: #{sandwich_forward.2} parent=11 // pred_fallthru
        _
    $region12: #{sandwich_forward.2} parent=5 // pred_fallthru
      _
    %p142 = scmp.lt.s32.totalorder %s9, 2
    // Predicated region
    $region17: #{sandwich_forward.2} parent=5 // pred_check
      %p143 = pneg %p142
    $region18: #{sandwich_forward.2} parent=5 // pred_check_branch
      %145 = sbr.rel (%p143) target = $region20
    $region19: #{sandwich_forward.2} parent=5 // pred_region
      // Predicated region
      $region21: #{sandwich_forward.2} parent=19 // pred_check
        %p146 = pneg %p64
      $region22: #{sandwich_forward.2} parent=19 // pred_check_branch
        %148 = sbr.rel (%p146) target = $region24
      $region23: #{sandwich_forward.2} parent=19 // pred_region
        %p149 = scmp.lt.s32.totalorder %s16, 1
        %s150 = scalar_select %p149, %s16, 1
        %p151 = scmp.lt.s32.totalorder %s17, 0
        %s152 = scalar_select %p151, %s17, 0
        %s153 = smul.addr %s150, 2
        %s154 = sadd.s32 %s152, %s153
        %s155 = smul.addr %s154, 4
        %s156 = scalar_lea.vmem %s1, %s155
      $region24: #{sandwich_forward.2} parent=19 // pred_fallthru
        _
      // Predicated region
      $region25: #{sandwich_forward.2} parent=19 // pred_check
        %p157 = pneg %p92
      $region26: #{sandwich_forward.2} parent=19 // pred_check_branch
        %159 = sbr.rel (%p157) target = $region28
      $region27: #{sandwich_forward.2} parent=19 // pred_region
        %p160 = scmp.lt.s32.totalorder %s16, 1
        %s161 = scalar_select %p160, %s16, 1
        %p162 = scmp.lt.s32.totalorder %s17, 0
        %s163 = scalar_select %p162, %s17, 0
        %s164 = smul.addr %s161, 2
        %s165 = sadd.s32 %s163, %s164
        %s166 = smul.addr %s165, 4
        %s167 = scalar_lea.vmem %s2, %s166
      $region28: #{sandwich_forward.2} parent=19 // pred_fallthru
        _
    $region20: #{sandwich_forward.2} parent=5 // pred_fallthru
      _
    %p168 = scmp.le.s32.totalorder 1, %s9
    %p169 = scmp.lt.s32.totalorder %s9, 3
    %p170 = pnand %p168, %p169
    %p171 = pneg %p170
    // Predicated region
    $region29: #{sandwich_forward.2} parent=5 // pred_check
      _
    $region30: #{sandwich_forward.2} parent=5 // pred_check_branch
      %173 = sbr.rel (%p170) target = $region32
    $region31: #{sandwich_forward.2} parent=5 // pred_region
      %s174 = ssub.s32 %s9, 1
      %p175 = pneg %p42
      %p176 = pneg %p39
      %p177 = scmp.lt.s32.totalorder %s18, 1
      %s178 = scalar_select %p177, %s18, 1
      %p179 = scmp.lt.s32.totalorder %s19, 0
      %s180 = scalar_select %p179, %s19, 0
      %s181 = smul.addr %s178, 2
      %s182 = sadd.s32 %s180, %s181
      %s183 = smul.addr %s182, 4
      %s184 = scalar_lea.vmem %s1, %s183
      %p185 = pneg %p70
      %p186 = pneg %p67
      %p187 = scmp.lt.s32.totalorder %s18, 1
      %s188 = scalar_select %p187, %s18, 1
      %p189 = scmp.lt.s32.totalorder %s19, 0
      %s190 = scalar_select %p189, %s19, 0
      %s191 = smul.addr %s188, 2
      %s192 = sadd.s32 %s190, %s191
      %s193 = smul.addr %s192, 4
      %s194 = scalar_lea.vmem %s2, %s193
      %p195 = pneg %p98
      %p196 = pneg %p95
      %p197 = pneg %p124
      %p198 = pneg %p121
      %p199 = scmp.lt.s32.totalorder %s18, 1
      %s200 = scalar_select %p199, %s18, 1
      %s201 = smul.addr %s200, 8
      %s202 = scalar_lea.vmem %s3, %s201
      %p203 = scmp.lt.s32.totalorder %s18, 1
      %s204 = scalar_select %p203, %s18, 1
      %p205 = scmp.lt.s32.totalorder %s19, 0
      %s206 = scalar_select %p205, %s19, 0
      %s207 = smul.addr %s204, 2
      %s208 = sadd.s32 %s206, %s207
      %s209 = smul.addr %s208, 4
      %s210 = scalar_lea.vmem %s1, %s209
      %p211 = scmp.lt.s32.totalorder %s18, 1
      %s212 = scalar_select %p211, %s18, 1
      %p213 = scmp.lt.s32.totalorder %s19, 0
      %s214 = scalar_select %p213, %s19, 0
      %s215 = smul.addr %s212, 2
      %s216 = sadd.s32 %s214, %s215
      %s217 = smul.addr %s216, 4
      %s218 = scalar_lea.vmem %s2, %s217
      %p219 = scmp.lt.s32.totalorder %s18, 1
      %s220 = scalar_select %p219, %s18, 1
      %s221 = smul.addr %s220, 8
      %s222 = scalar_lea.vmem %s3, %s221
      %p224 = scmp.eq.s32.totalorder %s19, 0
      // Predicated region
      $region33: #{sandwich_forward.2} parent=31 // pred_check
        %p225 = pneg %p224
      $region34: #{sandwich_forward.2} parent=31 // pred_check_branch
        %227 = sbr.rel (%p225) target = $region36
      $region35: #{sandwich_forward.2} parent=31 // pred_region
        %vm228 = vcmask 15360
        %229 = vst.msk [vmem:[%s222] sm:$0xff] %vm228, 0.0
      $region36: #{sandwich_forward.2} parent=31 // pred_fallthru
        _
      %v230 = vld [vmem:[%s0] sm:$0xf]
      %v231 = vld [vmem:[%s210] sm:$0xf]
      %v232 = vld [vmem:[%s210 + $0x4] sm:$0x3]
      %v235 = vunpack.c.l.b16 %v231
      %v236 = vunpack.c.l.b16 %v232
      %v237 = vpack.c.b16 %v236, %v235
      %vm238 = vcmask 97280
      %v240 = vsel %vm238, %v230, 0
      %vm242 = vcmask 1045504
      %v244 = vsel %vm242, %v237, 0
      %246 = vmatprep.subr.bf16.mxu0 0
      %247 = vmatpush1.bf16.msra.mxu0 %v244
      %248 = vmatprep.subr.bf16.mxu0 0
      %249 = vmatpush1.bf16.msra.mxu0 0
      %250 = vmatprep.subr.bf16.mxu0 0
      %251 = vmatpush1.bf16.msra.mxu0 0
      %252 = vmatprep.subr.bf16.mxu0 0
      %253 = vmatpush1.bf16.msra.mxu0 0
      %254 = vmatprep.subr.bf16.mxu0 0
      %255 = vmatpush1.bf16.msra.mxu0 0
      %256 = vmatprep.subr.bf16.mxu0 0
      %257 = vmatpush1.bf16.msra.mxu0 0
      %258 = vmatprep.subr.bf16.mxu0 0
      %259 = vmatpush1.bf16.msra.mxu0 0
      %260 = vmatprep.subr.bf16.mxu0 0
      %261 = vmatpush1.bf16.msra.mxu0 0
      %262 = vmatprep.subr.bf16.mxu0 0
      %263 = vmatpush1.bf16.msra.mxu0 0
      %264 = vmatprep.subr.bf16.mxu0 0
      %265 = vmatpush1.bf16.msra.mxu0 0
      %266 = vmatprep.subr.bf16.mxu0 0
      %267 = vmatpush1.bf16.msra.mxu0 0
      %268 = vmatprep.subr.bf16.mxu0 0
      %269 = vmatpush1.bf16.msra.mxu0 0
      %270 = vmatprep.subr.bf16.mxu0 0
      %271 = vmatpush1.bf16.msra.mxu0 0
      %272 = vmatprep.subr.bf16.mxu0 0
      %273 = vmatpush1.bf16.msra.mxu0 0
      %274 = vmatprep.subr.bf16.mxu0 0
      %275 = vmatpush1.bf16.msra.mxu0 0
      %276 = vmatprep.subr.bf16.mxu0 0
      %277 = vmatpush1.bf16.msra.mxu0 0
      %278 = vmatprep.mubr.bf16.mxu0 0
      %279 = vmatmul.mubr.bf16.gmra.mrb[0].mxu0 %v240
      %v280 = vpop.f32.mrb[0].mxu0
      %v281 = vadd.f32 0.0, %v280
      %v282 = vpop.f32.mrb[0].mxu0
      %v283 = vpop.f32.mrb[0].mxu0
      %v284 = vpop.f32.mrb[0].mxu0
      %285 = vdwg.mxu0
      %v286 = vld [vmem:[%s218] sm:$0xf]
      %v287 = vld [vmem:[%s218 + $0x4] sm:$0x3]
      %v290 = vunpack.c.l.b16 %v286
      %v291 = vunpack.c.l.b16 %v287
      %v292 = vpack.c.b16 %v291, %v290
      %v294 = vsel %vm242, %v292, 0
      %296 = vmatprep.subr.bf16.mxu0 0
      %297 = vmatpush1.bf16.msra.mxu0 %v294
      %298 = vmatprep.subr.bf16.mxu0 0
      %299 = vmatpush1.bf16.msra.mxu0 0
      %300 = vmatprep.subr.bf16.mxu0 0
      %301 = vmatpush1.bf16.msra.mxu0 0
      %302 = vmatprep.subr.bf16.mxu0 0
      %303 = vmatpush1.bf16.msra.mxu0 0
      %304 = vmatprep.subr.bf16.mxu0 0
      %305 = vmatpush1.bf16.msra.mxu0 0
      %306 = vmatprep.subr.bf16.mxu0 0
      %307 = vmatpush1.bf16.msra.mxu0 0
      %308 = vmatprep.subr.bf16.mxu0 0
      %309 = vmatpush1.bf16.msra.mxu0 0
      %310 = vmatprep.subr.bf16.mxu0 0
      %311 = vmatpush1.bf16.msra.mxu0 0
      %312 = vmatprep.subr.bf16.mxu0 0
      %313 = vmatpush1.bf16.msra.mxu0 0
      %314 = vmatprep.subr.bf16.mxu0 0
      %315 = vmatpush1.bf16.msra.mxu0 0
      %316 = vmatprep.subr.bf16.mxu0 0
      %317 = vmatpush1.bf16.msra.mxu0 0
      %318 = vmatprep.subr.bf16.mxu0 0
      %319 = vmatpush1.bf16.msra.mxu0 0
      %320 = vmatprep.subr.bf16.mxu0 0
      %321 = vmatpush1.bf16.msra.mxu0 0
      %322 = vmatprep.subr.bf16.mxu0 0
      %323 = vmatpush1.bf16.msra.mxu0 0
      %324 = vmatprep.subr.bf16.mxu0 0
      %325 = vmatpush1.bf16.msra.mxu0 0
      %326 = vmatprep.subr.bf16.mxu0 0
      %327 = vmatpush1.bf16.msra.mxu0 0
      %328 = vmatprep.mubr.bf16.mxu0 0
      %329 = vmatmul.mubr.bf16.gmra.mrb[0].mxu0 %v240
      %v330 = vpop.f32.mrb[0].mxu0
      %v331 = vadd.f32 0.0, %v330
      %v332 = vpop.f32.mrb[0].mxu0
      %v333 = vpop.f32.mrb[0].mxu0
      %v334 = vpop.f32.mrb[0].mxu0
      %335 = vdwg.mxu0
      %v336 = vlaneseq
      %v337 = vand.u32 %v336, 127
      %s338 = smul.u32 %s19, 8
      %v339 = vstv %s338
      %v340 = vadd.s32 %v337, %v339
      %v341 = vmul.u32 %v340, 2
      %vm342 = vcmp.lt.s32.totalorder %v341, 16
      %v343 = vsel %vm342, 1, 0
      %vm344 = vcmp.eq.s32.totalorder %v343, 1
      %v345 = vsel %vm344, %v281, 0.0
      %v346 = vadd.s32 %v341, 1
      %vm347 = vcmp.lt.s32.totalorder %v346, 16
      %v348 = vsel %vm347, 1, 0
      %vm349 = vcmp.eq.s32.totalorder %v348, 1
      %v350 = vsel %vm349, %v331, 0.0
      %vm351 = vcmask 64512
      %v352 = vsel %vm351, %v345, 0.0
      %353 = vadd.xlane.f32.xlu0 %v352
      %v354 = vpop.xlane.xlu0 %353
      %v355 = vsel %vm351, %v350, 0.0
      %356 = vadd.xlane.f32.xlu0 %v355
      %v357 = vpop.xlane.xlu0 %356
      %v358 = vadd.f32 %v354, %v357
      %v359 = vmul.f32 %v345, %v281
      %v360 = vsel %vm351, %v359, 0.0
      %361 = vadd.xlane.f32.xlu0 %v360
      %v362 = vpop.xlane.xlu0 %361
      %v363 = vmul.f32 %v350, %v331
      %v364 = vsel %vm351, %v363, 0.0
      %365 = vadd.xlane.f32.xlu0 %v364
      %v366 = vpop.xlane.xlu0 %365
      %v367 = vadd.f32 %v362, %v366
      %v368 = vld [vmem:[%s222] sm:$0xff]
      %vm369 = vcmask 7168
      %v370 = vsel %vm369, %v358, %v367
      %v371 = vadd.f32 %v368, %v370
      %vm372 = vcmask 15360
      %373 = vst.msk [vmem:[%s222] sm:$0xff] %vm372, %v371
      %p374 = scmp.lt.s32.totalorder %s18, 1
      %s375 = scalar_select %p374, %s18, 1
      %s376 = smul.addr %s375, 8
      %s377 = scalar_lea.vmem %s3, %s376
      // Predicated region
      $region37: #{sandwich_forward.2} parent=31 // pred_check
        %p378 = pneg %p121
      $region38: #{sandwich_forward.2} parent=31 // pred_check_branch
        %380 = sbr.rel (%p378) target = $region40
      $region39: #{sandwich_forward.2} parent=31 // pred_region
        _
      $region40: #{sandwich_forward.2} parent=31 // pred_fallthru
        _
    $region32: #{sandwich_forward.2} parent=5 // pred_fallthru
      _
    %p381 = scmp.le.s32.totalorder 2, %s9
    // Predicated region
    $region41: #{sandwich_forward.2} parent=5 // pred_check
      %p382 = pneg %p381
    $region42: #{sandwich_forward.2} parent=5 // pred_check_branch
      %384 = sbr.rel (%p382) target = $region44
    $region43: #{sandwich_forward.2} parent=5 // pred_region
      %s385 = ssub.s32 %s9, 2
      // Predicated region
      $region45: #{sandwich_forward.2} parent=43 // pred_check
        %p386 = pneg %p127
      $region46: #{sandwich_forward.2} parent=43 // pred_check_branch
        %388 = sbr.rel (%p386) target = $region48
      $region47: #{sandwich_forward.2} parent=43 // pred_region
        %p389 = scmp.lt.s32.totalorder %s20, 1
        %s390 = scalar_select %p389, %s20, 1
        %s391 = smul.addr %s390, 8
        %s392 = scalar_lea.vmem %s3, %s391
      $region48: #{sandwich_forward.2} parent=43 // pred_fallthru
        _
    $region44: #{sandwich_forward.2} parent=5 // pred_fallthru
      _
  $region6: #{sandwich_forward.2} parent=0 // loop_footer
    %s13 = sadd.s32 1, %s9
  $region7: #{sandwich_forward.2} parent=0 // loop_footer_branch
    %8 = sbr.rel target = $region3
  $region8: #{sandwich_forward.2} parent=0 // loop_exit
    _

</llo_original>
